<compile_context>
chip_gen: v7x
topology: tpu7x:2x2x1
jax: 0.10.0
libtpu: 0.0.40
codegen_flags: <defaults>
</compile_context>

<pallas_src>
import jax
import jax.numpy as jnp
from jax import lax
from jax.experimental import pallas as pl
from jax.experimental.pallas import tpu as pltpu

LANE = 128                      # vreg lane width (last dim of every tile)
SUB = 8                         # vreg sublane count
INPUT_VMEM_BUDGET = 16 << 20    # bytes for the double-buffered input streams
TM_HARD_CAP = 16384             # sanity cap on tile height (rows)
VMEM_LIMIT = 48 << 20           # > v5e's 16 MiB default scoped limit, < v7x 64 MiB physical


def _num_tensorcores():
    """Best-effort TensorCore count of the current chip (v7x has 2)."""
    try:
        info = pltpu.get_tpu_info()
        for name in ("num_cores", "core_count", "num_tensorcores", "tensorcore_count"):
            v = getattr(info, name, None)
            if isinstance(v, int) and v > 0:
                return v
    except Exception:
        pass
    v = getattr(jax.devices()[0], "num_cores", None)
    if isinstance(v, int) and v > 0:
        return v
    return 1


def _dice_partial_kernel(rows_valid, full_blocks, total_blocks, tm, tiles_per_core):
    """Accumulate per-core partial sums into the (1, 2, 8, 128) output block."""
    need_masked = full_blocks < total_blocks

    def kernel(x_ref, t_ref, o_ref):
        c = pl.program_id(0)   # core / row-range split       ("parallel")
        i = pl.program_id(1)   # tile within this core range  ("arbitrary")

        @pl.when(i == 0)
        def _():
            o_ref[...] = jnp.zeros_like(o_ref)

        blk = c * tiles_per_core + i   # logical (un-clamped) block id

        def accumulate(s, tt):
            # Sublane-only partial reduction: plain VPU adds, no per-tile
            # cross-lane XLU reduce and no scalar/SMEM serialization.
            o_ref[0, 0, :, :] += (s * tt).reshape(tm // SUB, SUB, LANE).sum(axis=0)
            o_ref[0, 1, :, :] += (s + tt).reshape(tm // SUB, SUB, LANE).sum(axis=0)

        def fast_body():
            # Interior tile: every row valid, no mask arithmetic at all.
            x = x_ref[...].astype(jnp.float32)
            t = t_ref[...].astype(jnp.float32)
            accumulate(jax.nn.sigmoid(x), t)

        def masked_body():
            # Ragged last tile or phantom (clamped) tile: row-level mask only.
            x = x_ref[...].astype(jnp.float32)
            t = t_ref[...].astype(jnp.float32)
            grow = blk * tm + lax.broadcasted_iota(jnp.int32, (tm, 1), 0)
            valid = grow < rows_valid
            # Keep the select (not multiply-by-mask): garbage rows of a
            # partial DMA may hold non-finite bits.
            accumulate(jnp.where(valid, jax.nn.sigmoid(x), 0.0),
                       jnp.where(valid, t, 0.0))

        if not need_masked:
            fast_body()
        elif full_blocks == 0:
            masked_body()
        else:
            pl.when(blk < full_blocks)(fast_body)
            pl.when(blk >= full_blocks)(masked_body)

    return kernel


def dice_loss(inputs, targets, smooth=1.0):
    """Pallas TPU implementation of DiceLoss.forward."""
    x_flat = inputs.reshape(-1)
    t_flat = targets.reshape(-1)
    n = x_flat.shape[0]

    rem = n % LANE
    n_aligned = n - rem
    rows = n_aligned // LANE

    # <128-element ragged tail: folded into the wrapper-side combine instead
    # of padding (and copying) both full arrays.
    tail_inter = jnp.float32(0.0)
    tail_denom = jnp.float32(0.0)
    if rem:
        xt = jax.nn.sigmoid(x_flat[n_aligned:].astype(jnp.float32))
        tt = t_flat[n_aligned:].astype(jnp.float32)
        tail_inter = jnp.sum(xt * tt)
        tail_denom = jnp.sum(xt) + jnp.sum(tt)

    if rows == 0:
        # Whole input is smaller than one lane row: pure-JAX path.
        dice = (2.0 * tail_inter + smooth) / (tail_denom + smooth)
        return 1.0 - dice

    if rem:
        # TODO(synk): XLA may materialize this prefix slice as a copy for
        # ragged sizes; 128-aligned inputs (the common case) reshape in place.
        x_flat = x_flat[:n_aligned]
        t_flat = t_flat[:n_aligned]

    x2 = x_flat.reshape(rows, LANE)
    t2 = t_flat.reshape(rows, LANE)

    rows_valid = rows
    if rows < SUB:  # tiny inputs: round the slab up to one (8, 128) tile
        x2 = jnp.pad(x2, ((0, SUB - rows), (0, 0)))
        t2 = jnp.pad(t2, ((0, SUB - rows), (0, 0)))
        rows = SUB

    # Dtype-aware tile height from a fixed VMEM byte budget
    # (2 inputs x 2 pipeline buffers); f32+f32 -> 8192 rows (16 MiB of buffers).
    bytes_per_row = 2 * LANE * (x2.dtype.itemsize + t2.dtype.itemsize)
    tm_cap = max(SUB, min(TM_HARD_CAP,
                          (INPUT_VMEM_BUDGET // bytes_per_row) // SUB * SUB))
    tm = max(SUB, min(tm_cap, (rows // SUB) * SUB))

    nblk = pl.cdiv(rows, tm)
    nc = 2 if (_num_tensorcores() >= 2 and nblk >= 2) else 1
    tiles_per_core = pl.cdiv(nblk, nc)
    total_blocks = nc * tiles_per_core
    full_blocks = rows_valid // tm          # blocks whose rows are all valid

    if total_blocks == nblk:
        def in_map(c, i):
            return (c * tiles_per_core + i, 0)
    else:
        # Phantom block (odd nblk with nc=2): clamp to a real block; its
        # contribution is zeroed by the row mask in the kernel.
        def in_map(c, i):
            return (jnp.minimum(c * tiles_per_core + i, nblk - 1), 0)

    cost = pl.CostEstimate(
        flops=8 * n_aligned,
        transcendentals=n_aligned,
        bytes_accessed=n_aligned * (x2.dtype.itemsize + t2.dtype.itemsize)
        + nc * 2 * SUB * LANE * 4,
    )

    partials = pl.pallas_call(
        _dice_partial_kernel(rows_valid, full_blocks, total_blocks, tm, tiles_per_core),
        out_shape=jax.ShapeDtypeStruct((nc, 2, SUB, LANE), jnp.float32),
        grid_spec=pltpu.PrefetchScalarGridSpec(
            num_scalar_prefetch=0,
            grid=(nc, tiles_per_core),
            in_specs=[
                pl.BlockSpec((tm, LANE), in_map),
                pl.BlockSpec((tm, LANE), in_map),
            ],
            out_specs=pl.BlockSpec((1, 2, SUB, LANE), lambda c, i: (c, 0, 0, 0)),
        ),
        compiler_params=pltpu.CompilerParams(
            dimension_semantics=("parallel", "arbitrary"),
            vmem_limit_bytes=VMEM_LIMIT,
        ),
        cost_estimate=cost,
    )(x2, t2)

    # Tiny final combine (a few KB) + dice formula in the wrapper.
    inter = jnp.sum(partials[:, 0]) + tail_inter
    denom = jnp.sum(partials[:, 1]) + tail_denom
    dice = (2.0 * inter + smooth) / (denom + smooth)
    return 1.0 - dice


def dice_loss_ref(inputs, targets, smooth=1.0):
    """Pure-JAX reference mirroring the PyTorch module."""
    s = jax.nn.sigmoid(inputs.reshape(-1).astype(jnp.float32))
    t = targets.reshape(-1).astype(jnp.float32)
    inter = jnp.sum(s * t)
    dice = (2.0 * inter + smooth) / (jnp.sum(s) + jnp.sum(t) + smooth)
    return 1.0 - dice


if __name__ == "__main__":
    key = jax.random.PRNGKey(0)
    k1, k2, k3, k4 = jax.random.split(key, 4)

    # NCHW-like logits and binary targets (segmentation), 128-aligned numel:
    # exercises the copy-free fast path (no mask arithmetic at all).
    x = jax.random.normal(k1, (2, 4, 16, 16), dtype=jnp.float32)
    t = (jax.random.uniform(k2, (2, 4, 16, 16)) > 0.5).astype(jnp.float32)
    out = dice_loss(x, t, smooth=1.0)
    jax.block_until_ready(out)
    ref = dice_loss_ref(x, t, smooth=1.0)
    assert jnp.allclose(out, ref, atol=1e-5, rtol=1e-5), (out, ref)

    # Ragged shape: exercises the wrapper-side tail, the gated row mask on the
    # partial last tile, and (on 2-TC chips) the core split.
    x2 = jax.random.normal(k3, (3, 5, 7, 11), dtype=jnp.float32)
    t2 = (jax.random.uniform(k4, (3, 5, 7, 11)) > 0.5).astype(jnp.float32)
    out2 = dice_loss(x2, t2, smooth=1.0)
    jax.block_until_ready(out2)
    ref2 = dice_loss_ref(x2, t2, smooth=1.0)
    assert jnp.allclose(out2, ref2, atol=1e-5, rtol=1e-5), (out2, ref2)

    print("KERNEL_OK")
</pallas_src>

<mosaic_0001>
module attributes {stable_mosaic.version = 11 : i64} {
  func.func @kernel(%arg0: i32, %arg1: i32, %arg2: memref<16x128xf32, #tpu.memory_space<vmem>>, %arg3: memref<16x128xf32, #tpu.memory_space<vmem>>, %arg4: memref<1x2x8x128xf32, #tpu.memory_space<vmem>>) attributes {dimension_semantics = [#tpu.dimension_semantics<parallel>, #tpu.dimension_semantics<arbitrary>], iteration_bounds = array<i64: 1, 1>, scalar_prefetch = 0 : i64, scratch_operands = 0 : i64, tpu.core_type = #tpu.core_type<tc>, window_params = [{transform_indices = @transform_0, window_bounds = array<i64: 16, 128>}, {transform_indices = @transform_1, window_bounds = array<i64: 16, 128>}, {transform_indices = @transform_2, window_bounds = array<i64: 1, 2, 8, 128>}]} {
    %c0_i32 = arith.constant 0 : i32
    %0 = arith.cmpi eq, %arg1, %c0_i32 : i32
    %1 = arith.extui %0 : i1 to i32
    %c0_i32_0 = arith.constant 0 : i32
    %2 = arith.cmpi ne, %1, %c0_i32_0 : i32
    scf.if %2 {
      %cst_21 = arith.constant 0.000000e+00 : f32
      %28 = vector.broadcast %cst_21 : f32 to vector<1x2x8x128xf32>
      %c0_22 = arith.constant 0 : index
      %c0_23 = arith.constant 0 : index
      %c0_24 = arith.constant 0 : index
      %c0_25 = arith.constant 0 : index
      %29 = vector.load %arg4[%c0_22, %c0_23, %c0_24, %c0_25] : memref<1x2x8x128xf32, #tpu.memory_space<vmem>>, vector<1x2x8x128xf32>
      tpu.vector_store %arg4[%c0_22, %c0_23, %c0_24, %c0_25], %28 {strides = array<i32>} : memref<1x2x8x128xf32, #tpu.memory_space<vmem>>, vector<1x2x8x128xf32>,
    } else {
    }
    %c0 = arith.constant 0 : index
    %c0_1 = arith.constant 0 : index
    %3 = vector.load %arg2[%c0, %c0_1] : memref<16x128xf32, #tpu.memory_space<vmem>>, vector<16x128xf32>
    %c0_2 = arith.constant 0 : index
    %c0_3 = arith.constant 0 : index
    %4 = vector.load %arg3[%c0_2, %c0_3] : memref<16x128xf32, #tpu.memory_space<vmem>>, vector<16x128xf32>
    %5 = arith.negf %3 : vector<16x128xf32>
    %6 = math.exp %5 : vector<16x128xf32>
    %cst = arith.constant 1.000000e+00 : f32
    %7 = vector.broadcast %cst : f32 to vector<16x128xf32>
    %8 = arith.addf %7, %6 : vector<16x128xf32>
    %9 = arith.divf %7, %8 : vector<16x128xf32>
    %c0_4 = arith.constant 0 : index
    %c0_5 = arith.constant 0 : index
    %c0_6 = arith.constant 0 : index
    %c0_7 = arith.constant 0 : index
    %10 = vector.load %arg4[%c0_4, %c0_5, %c0_6, %c0_7] : memref<1x2x8x128xf32, #tpu.memory_space<vmem>>, vector<1x1x8x128xf32>
    %11 = vector.shape_cast %10 : vector<1x1x8x128xf32> to vector<8x128xf32>
    %12 = arith.mulf %9, %4 : vector<16x128xf32>
    %13 = vector.shape_cast %12 : vector<16x128xf32> to vector<2x8x128xf32>
    %cst_8 = arith.constant dense<0.000000e+00> : vector<8x128xf32>
    %14 = vector.multi_reduction <add>, %13, %cst_8 [0] : vector<2x8x128xf32> to vector<8x128xf32>
    %15 = arith.addf %11, %14 : vector<8x128xf32>
    %c0_9 = arith.constant 0 : index
    %c0_10 = arith.constant 0 : index
    %c0_11 = arith.constant 0 : index
    %c0_12 = arith.constant 0 : index
    %16 = vector.load %arg4[%c0_9, %c0_10, %c0_11, %c0_12] : memref<1x2x8x128xf32, #tpu.memory_space<vmem>>, vector<1x1x8x128xf32>
    %17 = vector.shape_cast %16 : vector<1x1x8x128xf32> to vector<8x128xf32>
    %18 = vector.shape_cast %15 : vector<8x128xf32> to vector<1x1x8x128xf32>
    tpu.vector_store %arg4[%c0_9, %c0_10, %c0_11, %c0_12], %18 {strides = array<i32>} : memref<1x2x8x128xf32, #tpu.memory_space<vmem>>, vector<1x1x8x128xf32>,
    %c0_13 = arith.constant 0 : index
    %c1 = arith.constant 1 : index
    %c0_14 = arith.constant 0 : index
    %c0_15 = arith.constant 0 : index
    %19 = vector.load %arg4[%c0_13, %c1, %c0_14, %c0_15] : memref<1x2x8x128xf32, #tpu.memory_space<vmem>>, vector<1x1x8x128xf32>
    %20 = vector.shape_cast %19 : vector<1x1x8x128xf32> to vector<8x128xf32>
    %21 = arith.addf %9, %4 : vector<16x128xf32>
    %22 = vector.shape_cast %21 : vector<16x128xf32> to vector<2x8x128xf32>
    %cst_16 = arith.constant dense<0.000000e+00> : vector<8x128xf32>
    %23 = vector.multi_reduction <add>, %22, %cst_16 [0] : vector<2x8x128xf32> to vector<8x128xf32>
    %24 = arith.addf %20, %23 : vector<8x128xf32>
    %c0_17 = arith.constant 0 : index
    %c1_18 = arith.constant 1 : index
    %c0_19 = arith.constant 0 : index
    %c0_20 = arith.constant 0 : index
    %25 = vector.load %arg4[%c0_17, %c1_18, %c0_19, %c0_20] : memref<1x2x8x128xf32, #tpu.memory_space<vmem>>, vector<1x1x8x128xf32>
    %26 = vector.shape_cast %25 : vector<1x1x8x128xf32> to vector<8x128xf32>
    %27 = vector.shape_cast %24 : vector<8x128xf32> to vector<1x1x8x128xf32>
    tpu.vector_store %arg4[%c0_17, %c1_18, %c0_19, %c0_20], %27 {strides = array<i32>} : memref<1x2x8x128xf32, #tpu.memory_space<vmem>>, vector<1x1x8x128xf32>,
    return
  }
  func.func @transform_0(%arg0: i32, %arg1: i32) -> (i32, i32) {
    %c1_i32 = arith.constant 1 : i32
    %0 = arith.muli %arg0, %c1_i32 : i32
    %1 = arith.addi %0, %arg1 : i32
    %c0_i32 = arith.constant 0 : i32
    %c0_i32_0 = arith.constant 0 : i32
    return %1, %c0_i32 : i32, i32
  }
  func.func @transform_1(%arg0: i32, %arg1: i32) -> (i32, i32) {
    %c1_i32 = arith.constant 1 : i32
    %0 = arith.muli %arg0, %c1_i32 : i32
    %1 = arith.addi %0, %arg1 : i32
    %c0_i32 = arith.constant 0 : i32
    %c0_i32_0 = arith.constant 0 : i32
    return %1, %c0_i32 : i32, i32
  }
  func.func @transform_2(%arg0: i32, %arg1: i32) -> (i32, i32, i32, i32) {
    %c0_i32 = arith.constant 0 : i32
    %c0_i32_0 = arith.constant 0 : i32
    %c0_i32_1 = arith.constant 0 : i32
    %c0_i32_2 = arith.constant 0 : i32
    return %arg0, %c0_i32, %c0_i32_0, %c0_i32_1 : i32, i32, i32, i32
  }
}

</mosaic_0001>

<llo_original>
// kernel: tpu_custom_call.1
$region0: #{tpu_custom_call.1}
  #allocation0 [shape = 'u32[]', space=smem, size = 0x4, offset = 0x4, fixed_abs, tag = 'smem constant byte address 0x4 - core index']
  #allocation1 [shape = 'u32[144,128]{1,0:T(1,128)}', space=vmem, size = 0x12000, scoped, tag = 'internal scratch']
  %s0 = inlined_call_operand.hbm [shape: f32[16,128], index: 0, kind: input, shape index: {}]
  %s1 = inlined_call_operand.hbm [shape: f32[16,128], index: 1, kind: input, shape index: {}]
  %s2 = inlined_call_operand.hbm [shape: f32[1,2,8,128], index: 2, kind: output, shape index: {}]
  %s3 = sld [smem:[#allocation0]]
  $region30: #{tpu_custom_call.1} parent=0
    _
  %s5 = ssub.s32 1, %s3
  %s6 = scalar_select 0, %s5, %s3
  $region1: #{tpu_custom_call.1} parent=0
    #allocation2 [shape = 'u8[8192]{0}', space=vmem, size = 0x2000, scoped, tag = 'input window, operand 0, single buffered']
    #allocation3 [shape = 's32[1]{0}', space=sflag, size = 0x4, scoped, tag = 'scoped memory for tpu_custom_call.1']
    #allocation4 [shape = 's32[1]{0}', space=sflag, size = 0x4, scoped, tag = 'scoped memory for tpu_custom_call.1']
    #allocation5 [shape = 'u8[8192]{0}', space=vmem, size = 0x2000, scoped, tag = 'input window, operand 1, single buffered']
    #allocation6 [shape = 's32[1]{0}', space=sflag, size = 0x4, scoped, tag = 'scoped memory for tpu_custom_call.1']
    #allocation7 [shape = 'u8[8192]{0}', space=vmem, size = 0x2000, scoped, tag = 'output window, operand 0, single buffered']
    %7 = vsyncpa [#allocation3], 0
    %8 = vsyncpa [#allocation6], 0
    %9 = vsyncpa [#allocation4], 0
    // Predicated region
    $region2: #{tpu_custom_call.1} parent=1 // pred_check
      _
    $region3: #{tpu_custom_call.1} parent=1 // pred_check_branch
      %11 = sbr.rel (0) target = $region5
    $region4: #{tpu_custom_call.1} parent=1 // pred_region
      %s12 = sadd.s32 0, 0
      %s13 = smul.u32 2, %s12
      %s15 = ssub.s32 256, 256
      %16 = vsyncadd [#allocation3], %s15
      %s17 = smul.addr %s13, 128
      %s18 = scalar_lea.hbm %s0, %s17
      %s19 = sshll.u32 [#allocation2], 4
      %s20 = int_to_ptr.vmem [resolvable:$true] %s19
      %25 = dma.hbm_to_vmem [thread:$0]  %s18, 256, %s20, [#allocation3], 128, 128, 8
    $region5: #{tpu_custom_call.1} parent=1 // pred_fallthru
      _
    // Predicated region
    $region6: #{tpu_custom_call.1} parent=1 // pred_check
      _
    $region7: #{tpu_custom_call.1} parent=1 // pred_check_branch
      %27 = sbr.rel (0) target = $region9
    $region8: #{tpu_custom_call.1} parent=1 // pred_region
      %s28 = sadd.s32 0, 0
      %s29 = smul.u32 2, %s28
      %s31 = ssub.s32 256, 256
      %32 = vsyncadd [#allocation6], %s31
      %s33 = smul.addr %s29, 128
      %s34 = scalar_lea.hbm %s1, %s33
      %s35 = sshll.u32 [#allocation5], 4
      %s36 = int_to_ptr.vmem [resolvable:$true] %s35
      %41 = dma.hbm_to_vmem [thread:$0]  %s34, 256, %s36, [#allocation6], 128, 128, 8
    $region9: #{tpu_custom_call.1} parent=1 // pred_fallthru
      _
    // Predicated region
    $region10: #{tpu_custom_call.1} parent=1 // pred_check
      _
    $region11: #{tpu_custom_call.1} parent=1 // pred_check_branch
      %43 = sbr.rel (0) target = $region13
    $region12: #{tpu_custom_call.1} parent=1 // pred_region
      %44 = dma.done [#allocation3], 256
    $region13: #{tpu_custom_call.1} parent=1 // pred_fallthru
      _
    // Predicated region
    $region14: #{tpu_custom_call.1} parent=1 // pred_check
      _
    $region15: #{tpu_custom_call.1} parent=1 // pred_check_branch
      %46 = sbr.rel (0) target = $region17
    $region16: #{tpu_custom_call.1} parent=1 // pred_region
      %47 = dma.done [#allocation6], 256
    $region17: #{tpu_custom_call.1} parent=1 // pred_fallthru
      _
    %s48 = sadd.s32 0, 0
    %s49 = smul.u32 2, %s48
    %s50 = sadd.s32 0, 0
    %s51 = smul.u32 2, %s50
    %p52 = scmp.eq.s32.totalorder 0, 0
    // Predicated region
    $region18: #{tpu_custom_call.1} parent=1 // pred_check
      %p53 = pneg %p52
    $region19: #{tpu_custom_call.1} parent=1 // pred_check_branch
      %55 = sbr.rel (%p53) target = $region21
    $region20: #{tpu_custom_call.1} parent=1 // pred_region
      %56 = vst [vmem:[#allocation7] sm:$0xff] 0.0
      %57 = vst [vmem:[#allocation7 + $0x8] sm:$0xff] 0.0
    $region21: #{tpu_custom_call.1} parent=1 // pred_fallthru
      _
    %v58 = vld [vmem:[#allocation2] sm:$0xff]
    %v59 = vld [vmem:[#allocation2 + $0x8] sm:$0xff]
    %v60 = vld [vmem:[#allocation5] sm:$0xff]
    %v61 = vld [vmem:[#allocation5 + $0x8] sm:$0xff]
    %v62 = vxor.u32 %v58, 2147483648
    %v63 = vxor.u32 %v59, 2147483648
    %v64 = vmul.f32 %v62, 1.442695
    %v65 = vpow.pop %v64
    %v66 = vmul.f32 %v63, 1.442695
    %v67 = vpow.pop %v66
    %v68 = vadd.f32 %v65, 1.0
    %v69 = vadd.f32 %v67, 1.0
    %v70 = vrcp.pop %v68
    %v71 = vmul.f32 1.0, %v70
    %v72 = vrcp.pop %v69
    %v73 = vmul.f32 1.0, %v72
    %v74 = vld [vmem:[#allocation7] sm:$0xff]
    %v75 = vmul.f32 %v71, %v60
    %v76 = vmul.f32 %v73, %v61
    %v77 = vadd.f32 %v75, %v76
    %v78 = vadd.f32 %v74, %v77
    %79 = vst [vmem:[#allocation7] sm:$0xff] %v78
    %s80 = scalar_lea.vmem [#allocation7], 8
    %v81 = vld [vmem:[%s80] sm:$0xff]
    %v82 = vadd.f32 %v71, %v60
    %v83 = vadd.f32 %v73, %v61
    %v84 = vadd.f32 %v82, %v83
    %v85 = vadd.f32 %v81, %v84
    %86 = vst [vmem:[%s80] sm:$0xff] %v85
    // Predicated region
    $region22: #{tpu_custom_call.1} parent=1 // pred_check
      _
    $region23: #{tpu_custom_call.1} parent=1 // pred_check_branch
      %88 = sbr.rel (0) target = $region25
    $region24: #{tpu_custom_call.1} parent=1 // pred_region
      %s90 = ssub.s32 256, 256
      %91 = vsyncadd [#allocation4], %s90
      %s92 = sshll.u32 [#allocation7], 4
      %s93 = int_to_ptr.vmem [resolvable:$true] %s92
      %98 = dma.vmem_to_hbm [thread:$0]  %s93, 256, %s2, [#allocation4], 128, 128, 8
    $region25: #{tpu_custom_call.1} parent=1 // pred_fallthru
      _
    // Predicated region
    $region26: #{tpu_custom_call.1} parent=1 // pred_check
      _
    $region27: #{tpu_custom_call.1} parent=1 // pred_check_branch
      %100 = sbr.rel (0) target = $region29
    $region28: #{tpu_custom_call.1} parent=1 // pred_region
      %101 = dma.done [#allocation4], 256
    $region29: #{tpu_custom_call.1} parent=1 // pred_fallthru
      _
    %102 = vsyncpa [#allocation3], 1
    %103 = vsyncpa [#allocation6], 1
    %104 = vsyncpa [#allocation4], 1

</llo_original>
